<compile_context>
chip_gen: v6e
topology: v6e:2x2x1
jax: 0.10.0
libtpu: 0.0.40
codegen_flags: <defaults>
</compile_context>

<pallas_src>
import functools

import jax
import jax.numpy as jnp
from jax.experimental import pallas as pl
from jax.experimental.pallas import tpu as pltpu

IN_DIM, H1, H2, OUT_DIM = 72, 64, 16, 3

# Max batch tile.  Real VMEM accounting (lane padding!): the (tb, 72) x tile
# and the (tb, 3) out tile are each padded to 128 lanes -> ~tb*512 B per
# buffer, ~2 KiB/row with double buffering -> 16 MiB at tb=8192.  That fits
# every generation under the 32 MiB scoped limit set below.
MAX_TB = 8192


def _round_up(n, m):
    return ((n + m - 1) // m) * m


def dnn_kernel(x_ref, w_ref, b_ref, o_ref, *, compute_dtype):
    x = x_ref[...]
    # Optional in-kernel cast: VPU op on data already in VMEM, so HBM traffic
    # is unchanged; bf16 MXU passes are ~3x cheaper than f32 (helps v7x,
    # neutral on DMA-bound v5e/v6e).
    if compute_dtype is not None:
        x = x.astype(compute_dtype)
    o_ref[...] = (
        jnp.dot(x, w_ref[...], preferred_element_type=jnp.float32) + b_ref[...]
    ).astype(o_ref.dtype)


def collapse_params(params):
    """Fold the 3 activation-free linear layers into one (W_eff, b_eff)."""
    w1, b1, w2, b2, w3, b3 = params
    w_eff = w1 @ w2 @ w3                      # (72, 3)
    b_eff = b1 @ w2 @ w3 + b2 @ w3 + b3       # (1, 3)
    return w_eff.astype(jnp.float32), b_eff.astype(jnp.float32)


@functools.partial(jax.jit, static_argnames=("tb_cap", "compute_dtype"))
def _dnn_forward_impl(x, w_eff, b_eff, *, tb_cap, compute_dtype):
    B = x.shape[0]

    # Adaptive batch tile: multiple of 8 (f32 sublane), <= tb_cap (VMEM), and
    # ~B/2 when the batch is small enough that tb_cap would give a single grid
    # step -- guarantees >=2 steps (when B > 8) so both v7x TensorCores work.
    # No padding of x: the trailing partial block is handled by Pallas (masked
    # store of the OOB rows; per-row compute is independent, so the garbage
    # rows read into the padded input tile are harmless).
    tb = min(tb_cap, max(8, _round_up(pl.cdiv(B, 2), 8)))
    grid = (pl.cdiv(B, tb),)

    if compute_dtype is not None:
        # Only the tiny collapsed weight (72x3) is pre-cast; x stays f32 in HBM
        # and is cast inside the kernel (no extra HBM pass).  Bias stays f32
        # (added post-accumulate).
        w_eff = w_eff.astype(compute_dtype)

    cost = pl.CostEstimate(
        flops=2 * B * IN_DIM * OUT_DIM,
        transcendentals=0,
        bytes_accessed=(
            x.size * x.dtype.itemsize
            + w_eff.size * w_eff.dtype.itemsize
            + b_eff.size * b_eff.dtype.itemsize
            + B * OUT_DIM * 4
        ),
    )

    return pl.pallas_call(
        functools.partial(dnn_kernel, compute_dtype=compute_dtype),
        out_shape=jax.ShapeDtypeStruct((B, OUT_DIM), jnp.float32),
        grid=grid,
        in_specs=[
            # x: tiled over the batch, double-buffered by the Pallas pipeline.
            pl.BlockSpec((tb, IN_DIM), lambda i: (i, 0)),
            # Collapsed weight / bias: tiny, VMEM-resident across all steps.
            pl.BlockSpec((IN_DIM, OUT_DIM), lambda i: (0, 0)),
            pl.BlockSpec((1, OUT_DIM), lambda i: (0, 0)),
        ],
        out_specs=pl.BlockSpec((tb, OUT_DIM), lambda i: (i, 0)),
        compiler_params=pltpu.CompilerParams(
            # Batch axis is embarrassingly parallel -> megacore sharding on
            # v7x, neutral on single-TC v5e/v6e.
            dimension_semantics=("parallel",),
            # Lane-padded, double-buffered x+out tiles need ~2 KiB/row; 32 MiB
            # covers tb=8192 with margin on every generation (v7x incl.).
            vmem_limit_bytes=32 * 1024 * 1024,
        ),
        cost_estimate=cost,
    )(x, w_eff, b_eff)


def dnn_forward(x, params, *, tb_cap=MAX_TB, compute_dtype=None):
    """Forward pass of DNN (eval mode).

    compute_dtype=jnp.bfloat16 casts x/W to bf16 *inside* the kernel (f32
    accumulation); recommended on v7x, neutral elsewhere.
    """
    w_eff, b_eff = collapse_params(params)
    return _dnn_forward_impl(x, w_eff, b_eff, tb_cap=tb_cap, compute_dtype=compute_dtype)


def init_params(key):
    """Deterministic init mimicking PyTorch nn.Linear default (U[-1/sqrt(fan_in), +])."""
    def linear(k, fan_in, fan_out):
        kw, kb = jax.random.split(k)
        bound = 1.0 / jnp.sqrt(fan_in)
        w = jax.random.uniform(kw, (fan_in, fan_out), jnp.float32, -bound, bound)
        b = jax.random.uniform(kb, (1, fan_out), jnp.float32, -bound, bound)
        return w, b

    k1, k2, k3 = jax.random.split(key, 3)
    w1, b1 = linear(k1, IN_DIM, H1)
    w2, b2 = linear(k2, H1, H2)
    w3, b3 = linear(k3, H2, OUT_DIM)
    return w1, b1, w2, b2, w3, b3


def reference_forward(x, params):
    """Un-collapsed 3-layer reference (dropout = identity in eval)."""
    w1, b1, w2, b2, w3, b3 = params
    h = x @ w1 + b1
    h = h @ w2 + b2
    return h @ w3 + b3


if __name__ == "__main__":
    key = jax.random.PRNGKey(0)
    kx, kp = jax.random.split(key)

    params = init_params(kp)

    # Small batch.
    B = 8
    x = jax.random.normal(kx, (B, IN_DIM), dtype=jnp.float32)

    # f32 path: must match the un-collapsed reference tightly.
    out = jax.block_until_ready(dnn_forward(x, params))
    ref = reference_forward(x, params)
    assert out.shape == (B, OUT_DIM)
    assert jnp.allclose(out, ref, atol=1e-4, rtol=1e-4), "f32 mismatch vs reference"

    # Ragged batch (B=13): exercises the un-padded partial trailing block and a
    # 2-step grid (tb=8), without any jnp.pad copy of x.
    x2 = jax.random.normal(kx, (B + 5, IN_DIM), dtype=jnp.float32)
    out2 = jax.block_until_ready(dnn_forward(x2, params))
    ref2 = reference_forward(x2, params)
    assert out2.shape == (B + 5, OUT_DIM)
    assert jnp.allclose(out2, ref2, atol=1e-4, rtol=1e-4), "ragged-batch mismatch"

    # bf16 path (in-kernel cast, f32 accumulation): looser tolerance.
    out_bf16 = jax.block_until_ready(dnn_forward(x, params, compute_dtype=jnp.bfloat16))
    assert out_bf16.shape == (B, OUT_DIM)
    assert jnp.allclose(out_bf16, ref, atol=5e-2, rtol=5e-2), "bf16 mismatch vs reference"

    print("KERNEL_OK")
</pallas_src>

<mosaic_0001>
module attributes {stable_mosaic.version = 11 : i64} {
  func.func @dnn_kernel(%arg0: i32, %arg1: memref<8x72xf32, #tpu.memory_space<vmem>>, %arg2: memref<72x3xf32, #tpu.memory_space<vmem>>, %arg3: memref<1x3xf32, #tpu.memory_space<vmem>>, %arg4: memref<8x3xf32, #tpu.memory_space<vmem>>) attributes {dimension_semantics = [#tpu.dimension_semantics<parallel>], iteration_bounds = array<i64: 1>, scalar_prefetch = 0 : i64, scratch_operands = 0 : i64, tpu.core_type = #tpu.core_type<tc>, window_params = [{transform_indices = @transform_0, window_bounds = array<i64: 8, 72>}, {pipeline_mode = #tpu.pipeline_mode<synchronous>, transform_indices = @transform_1, window_bounds = array<i64: 72, 3>}, {pipeline_mode = #tpu.pipeline_mode<synchronous>, transform_indices = @transform_2, window_bounds = array<i64: 1, 3>}, {transform_indices = @transform_3, window_bounds = array<i64: 8, 3>}]} {
    %c0 = arith.constant 0 : index
    %c0_0 = arith.constant 0 : index
    %0 = vector.load %arg1[%c0, %c0_0] : memref<8x72xf32, #tpu.memory_space<vmem>>, vector<8x72xf32>
    %c0_1 = arith.constant 0 : index
    %c0_2 = arith.constant 0 : index
    %1 = vector.load %arg2[%c0_1, %c0_2] : memref<72x3xf32, #tpu.memory_space<vmem>>, vector<72x3xf32>
    %cst = arith.constant dense<0.000000e+00> : vector<8x3xf32>
    %2 = tpu.matmul %0, %1, %cst {dimension_numbers = #tpu.dot_dimension_numbers<[1], [0], [0], [1], [0, 0, 1, 1], [], []>} : vector<8x72xf32>, vector<72x3xf32>, vector<8x3xf32> -> vector<8x3xf32>
    %c0_3 = arith.constant 0 : index
    %c0_4 = arith.constant 0 : index
    %3 = vector.load %arg3[%c0_3, %c0_4] : memref<1x3xf32, #tpu.memory_space<vmem>>, vector<1x3xf32>
    %4 = vector.broadcast %3 : vector<1x3xf32> to vector<8x3xf32>
    %5 = arith.addf %2, %4 : vector<8x3xf32>
    %c0_5 = arith.constant 0 : index
    %c0_6 = arith.constant 0 : index
    %6 = vector.load %arg4[%c0_5, %c0_6] : memref<8x3xf32, #tpu.memory_space<vmem>>, vector<8x3xf32>
    tpu.vector_store %arg4[%c0_5, %c0_6], %5 {strides = array<i32>} : memref<8x3xf32, #tpu.memory_space<vmem>>, vector<8x3xf32>,
    return
  }
  func.func @transform_0(%arg0: i32) -> (i32, i32) {
    %c0_i32 = arith.constant 0 : i32
    %c0_i32_0 = arith.constant 0 : i32
    return %arg0, %c0_i32 : i32, i32
  }
  func.func @transform_1(%arg0: i32) -> (i32, i32) {
    %c0_i32 = arith.constant 0 : i32
    %c0_i32_0 = arith.constant 0 : i32
    %c0_i32_1 = arith.constant 0 : i32
    return %c0_i32, %c0_i32_0 : i32, i32
  }
  func.func @transform_2(%arg0: i32) -> (i32, i32) {
    %c0_i32 = arith.constant 0 : i32
    %c0_i32_0 = arith.constant 0 : i32
    %c0_i32_1 = arith.constant 0 : i32
    return %c0_i32, %c0_i32_0 : i32, i32
  }
  func.func @transform_3(%arg0: i32) -> (i32, i32) {
    %c0_i32 = arith.constant 0 : i32
    %c0_i32_0 = arith.constant 0 : i32
    return %arg0, %c0_i32 : i32, i32
  }
}

</mosaic_0001>

<llo_original>
// kernel: _dnn_forward_impl.1
$region0: #{_dnn_forward_impl.1}
  #allocation0 [shape = 'u32[]', space=smem, size = 0x4, offset = 0x4, fixed_abs, tag = 'smem constant byte address 0x4 - core index']
  #allocation1 [shape = 'u32[144,128]{1,0:T(1,128)}', space=vmem, size = 0x12000, scoped, tag = 'internal scratch']
  %s0 = inlined_call_operand.vmem [shape: f32[8,72], index: 0, kind: input, shape index: {}]
  %s1 = inlined_call_operand.vmem [shape: f32[72,3], index: 1, kind: input, shape index: {}]
  %s2 = inlined_call_operand.vmem [shape: f32[1,3], index: 2, kind: input, shape index: {}]
  %s3 = inlined_call_operand.vmem [shape: f32[8,3], index: 3, kind: output, shape index: {}]
  %s4 = sld [smem:[#allocation0]]
  $region22: #{_dnn_forward_impl.1} parent=0
    _
  %s6 = ssub.s32 1, %s4
  %s7 = scalar_select 0, %s6, %s4
  // Predicated region
  $region2: #{_dnn_forward_impl.1} parent=0 // pred_check
    _
  $region3: #{_dnn_forward_impl.1} parent=0 // pred_check_branch
    %9 = sbr.rel (0) target = $region5
  $region4: #{_dnn_forward_impl.1} parent=0 // pred_region
    _
  $region5: #{_dnn_forward_impl.1} parent=0 // pred_fallthru
    _
  // Predicated region
  $region6: #{_dnn_forward_impl.1} parent=0 // pred_check
    _
  $region7: #{_dnn_forward_impl.1} parent=0 // pred_check_branch
    %11 = sbr.rel (0) target = $region9
  $region8: #{_dnn_forward_impl.1} parent=0 // pred_region
    _
  $region9: #{_dnn_forward_impl.1} parent=0 // pred_fallthru
    _
  // Predicated region
  $region10: #{_dnn_forward_impl.1} parent=0 // pred_check
    _
  $region11: #{_dnn_forward_impl.1} parent=0 // pred_check_branch
    %13 = sbr.rel (0) target = $region13
  $region12: #{_dnn_forward_impl.1} parent=0 // pred_region
    _
  $region13: #{_dnn_forward_impl.1} parent=0 // pred_fallthru
    _
  %v14 = vld [vmem:[%s0] sm:$0xff]
  %v15 = vld [vmem:[%s1] sm:$0xff]
  %v16 = vld [vmem:[%s1 + $0x8] sm:$0xff]
  %v17 = vld [vmem:[%s1 + $0x10] sm:$0xff]
  %v18 = vld [vmem:[%s1 + $0x18] sm:$0xff]
  %v19 = vld [vmem:[%s1 + $0x20] sm:$0xff]
  %v20 = vld [vmem:[%s1 + $0x28] sm:$0xff]
  %v21 = vld [vmem:[%s1 + $0x30] sm:$0xff]
  %v22 = vld [vmem:[%s1 + $0x38] sm:$0xff]
  %v23 = vld [vmem:[%s1 + $0x40] sm:$0xff]
  %v24 = vld [vmem:[%s2] sm:$0x1]
  %v26 = vlaneseq
  %v27 = vshrl.u32 %v26, 7
  %v28 = vsub.s32 0, %v27
  %v29 = vrot.slane %v24, %v28
  %vm31 = vcmask 588800
  %v33 = vsel %vm31, %v14, 0
  %35 = vmatprep.subr.mxu0 0.0
  %36 = vmatpush1.msra.mxu0 0.0
  %37 = vmatprep.subr.mxu0 0.0
  %38 = vmatpush1.msra.mxu0 0.0
  %39 = vmatprep.subr.mxu0 0.0
  %40 = vmatpush1.msra.mxu0 0.0
  %41 = vmatprep.subr.mxu0 0.0
  %42 = vmatpush1.msra.mxu0 0.0
  %43 = vmatprep.subr.mxu0 0.0
  %44 = vmatpush1.msra.mxu0 0.0
  %45 = vmatprep.subr.mxu0 0.0
  %46 = vmatpush1.msra.mxu0 0.0
  %47 = vmatprep.subr.mxu0 0.0
  %48 = vmatpush1.msra.mxu0 0.0
  %49 = vmatprep.subr.mxu0 0.0
  %50 = vmatpush1.msra.mxu0 %v23
  %51 = vmatprep.subr.mxu0 0.0
  %52 = vmatpush1.msra.mxu0 %v22
  %53 = vmatprep.subr.mxu0 0.0
  %54 = vmatpush1.msra.mxu0 %v21
  %55 = vmatprep.subr.mxu0 0.0
  %56 = vmatpush1.msra.mxu0 %v20
  %57 = vmatprep.subr.mxu0 0.0
  %58 = vmatpush1.msra.mxu0 %v19
  %59 = vmatprep.subr.mxu0 0.0
  %60 = vmatpush1.msra.mxu0 %v18
  %61 = vmatprep.subr.mxu0 0.0
  %62 = vmatpush1.msra.mxu0 %v17
  %63 = vmatprep.subr.mxu0 0.0
  %64 = vmatpush1.msra.mxu0 %v16
  %65 = vmatprep.subr.mxu0 0.0
  %66 = vmatpush1.msra.mxu0 %v15
  %67 = vmatprep.subr.mxu0 0.0
  %68 = vmatpush2.msra.mxu0 0.0
  %69 = vmatprep.subr.mxu0 0.0
  %70 = vmatpush2.msra.mxu0 0.0
  %71 = vmatprep.subr.mxu0 0.0
  %72 = vmatpush2.msra.mxu0 0.0
  %73 = vmatprep.subr.mxu0 0.0
  %74 = vmatpush2.msra.mxu0 0.0
  %75 = vmatprep.subr.mxu0 0.0
  %76 = vmatpush2.msra.mxu0 0.0
  %77 = vmatprep.subr.mxu0 0.0
  %78 = vmatpush2.msra.mxu0 0.0
  %79 = vmatprep.subr.mxu0 0.0
  %80 = vmatpush2.msra.mxu0 0.0
  %81 = vmatprep.subr.mxu0 0.0
  %82 = vmatpush2.msra.mxu0 0.0
  %83 = vmatprep.subr.mxu0 0.0
  %84 = vmatpush2.msra.mxu0 0.0
  %85 = vmatprep.subr.mxu0 0.0
  %86 = vmatpush2.msra.mxu0 0.0
  %87 = vmatprep.subr.mxu0 0.0
  %88 = vmatpush2.msra.mxu0 0.0
  %89 = vmatprep.subr.mxu0 0.0
  %90 = vmatpush2.msra.mxu0 0.0
  %91 = vmatprep.subr.mxu0 0.0
  %92 = vmatpush2.msra.mxu0 0.0
  %93 = vmatprep.subr.mxu0 0.0
  %94 = vmatpush2.msra.mxu0 0.0
  %95 = vmatprep.subr.mxu0 0.0
  %96 = vmatpush2.msra.mxu0 0.0
  %97 = vmatprep.subr.mxu0 0.0
  %98 = vmatpush2.msra.mxu0 0.0
  %99 = vmatprep.mubr.f32.mxu0 0.0
  %100 = vmatmul.mubr.f32.gmra.mxu0 %v33
  %v101 = vpop.f32.mrf.mxu0
  %v102 = vadd.f32 %v29, %v101
  %v103 = vpop.f32.mrf.mxu0
  %104 = vdwg.mxu0
  %vm105 = vcmask 23552
  %106 = vst.msk [vmem:[%s3] sm:$0xff] %vm105, %v102
  // Predicated region
  $region14: #{_dnn_forward_impl.1} parent=0 // pred_check
    _
  $region15: #{_dnn_forward_impl.1} parent=0 // pred_check_branch
    %108 = sbr.rel (0) target = $region17
  $region16: #{_dnn_forward_impl.1} parent=0 // pred_region
    _
  $region17: #{_dnn_forward_impl.1} parent=0 // pred_fallthru
    _
  // Predicated region
  $region18: #{_dnn_forward_impl.1} parent=0 // pred_check
    _
  $region19: #{_dnn_forward_impl.1} parent=0 // pred_check_branch
    %110 = sbr.rel (0) target = $region21
  $region20: #{_dnn_forward_impl.1} parent=0 // pred_region
    _
  $region21: #{_dnn_forward_impl.1} parent=0 // pred_fallthru
    _

</llo_original>
